<compile_context>
chip_gen: v7x
topology: tpu7x:2x2x1
jax: 0.10.0
libtpu: 0.0.40
codegen_flags: <defaults>
</compile_context>

<pallas_src>
import jax
import jax.numpy as jnp
from jax.experimental import pallas as pl
from jax.experimental.pallas import tpu as pltpu


HIDDEN = 256          # per-head hidden width (torch module uses 256)
TILE_B_MAX = 1024     # batch tile cap (weights ~0.3 MB bf16; hg f32 @1024 ~2 MB)
MIN_SPLIT_TILE = 256  # only force >=2 grid steps if each tile keeps >=256 rows


def _round_up(x, m):
    return ((x + m - 1) // m) * m


def _cdiv(a, b):
    return -(-a // b)


def _critic_kernel(
    sa_ref,                              # (tile_b, S+A) bf16
    w14_ref, b14_ref,                    # fused layer-1 (both heads): (S+A,512) bf16 / (1,512) f32
    w2_ref, b2_ref, w5_ref, b5_ref,      # layer-2 of head 1 / head 2
    w3_ref, w6_ref, b36_ref,             # layer-3 rows (1,256) f32 and (1,2) bias
    out_ref,                             # (tile_b, 2): [:, 0]=q1, [:, 1]=q2
):
    sa = sa_ref[...]

    # ---- fused layer 1 for both heads: single MXU push -> (tile_b, 512) f32 ----
    hg = jnp.dot(sa, w14_ref[...], preferred_element_type=jnp.float32) + b14_ref[...]
    hg = jnp.maximum(hg, 0.0)

    # split at lane 256 (lane-aligned static slice) into head-1 / head-2 halves
    h = hg[:, :HIDDEN].astype(jnp.bfloat16)
    g = hg[:, HIDDEN:].astype(jnp.bfloat16)

    # ---- layer 2 (per head): two independent 256x256 bf16 MXU matmuls ----
    h = jnp.maximum(
        jnp.dot(h, w2_ref[...], preferred_element_type=jnp.float32) + b2_ref[...], 0.0)
    g = jnp.maximum(
        jnp.dot(g, w5_ref[...], preferred_element_type=jnp.float32) + b5_ref[...], 0.0)

    # ---- layer 3 on VPU/XLU (free slots in this MXU-bound kernel) ----
    q1 = jnp.sum(h * w3_ref[...], axis=-1, keepdims=True)   # (tile_b, 1) f32
    q2 = jnp.sum(g * w6_ref[...], axis=-1, keepdims=True)   # (tile_b, 1) f32
    q12 = jnp.concatenate([q1, q2], axis=1) + b36_ref[...]  # (tile_b, 2)

    out_ref[...] = q12.astype(out_ref.dtype)


def critic_forward(state, action, params):
    """Pallas-backed forward. state: (B, S), action: (B, A). Returns (q1, q2), each (B, 1)."""
    B, S = state.shape
    A = action.shape[1]
    sa_dim = S + A

    # Host-side concat + bf16 cast: one input DMA stream, one fused layer-1 matmul.
    sa = jnp.concatenate([state, action], axis=1).astype(jnp.bfloat16)

    # ---- balanced batch tiling ----
    bp = _round_up(max(B, 8), 8)
    num_tiles = _cdiv(bp, TILE_B_MAX)
    if num_tiles == 1 and bp >= 2 * MIN_SPLIT_TILE:
        num_tiles = 2          # v7x: >=2 grid steps so both TensorCores are used
    tile_b = _round_up(_cdiv(bp, num_tiles), 8)
    bp = tile_b * num_tiles
    if bp != B:
        sa = jnp.pad(sa, ((0, bp - B), (0, 0)))

    weights = (
        params["w14"], params["b14"],
        params["w2"], params["b2"], params["w5"], params["b5"],
        params["w3_row"], params["w6_row"], params["b36"],
    )

    def _resident(shape):
        # Whole array, same block every grid step -> stays resident in VMEM.
        # TODO(synk): pipeline_mode=pl.Buffered(1) would drop the dead second
        # buffer for these constant blocks; left at default for compile safety.
        return pl.BlockSpec(shape, lambda i: (0, 0))

    in_specs = [pl.BlockSpec((tile_b, sa_dim), lambda i: (i, 0))]  # sa tile (streamed)
    in_specs += [_resident(w.shape) for w in weights]

    out_specs = pl.BlockSpec((tile_b, 2), lambda i: (i, 0))
    out_shape = jax.ShapeDtypeStruct((bp, 2), jnp.float32)

    flops = 2 * bp * (sa_dim * 2 * HIDDEN + 2 * HIDDEN * HIDDEN + 2 * HIDDEN)
    bytes_accessed = (
        int(sa.size) * 2                                     # bf16 input
        + bp * 2 * 4                                         # f32 output
        + sum(int(w.size) * w.dtype.itemsize for w in weights)
    )

    q = pl.pallas_call(
        _critic_kernel,
        out_shape=out_shape,
        grid=(num_tiles,),
        in_specs=in_specs,
        out_specs=out_specs,
        compiler_params=pltpu.CompilerParams(
            dimension_semantics=("parallel",)),
        cost_estimate=pl.CostEstimate(
            flops=flops, transcendentals=0, bytes_accessed=bytes_accessed),
    )(sa, *weights)

    q1 = q[:B, 0:1]
    q2 = q[:B, 1:2]
    return q1, q2


def init_params(key, state_dim, action_dim):
    """Per-layer f32 params mimicking torch.nn.Linear default init.

    Weights stored as (in_features, out_features); biases as (1, out_features).
    """
    sa_dim = state_dim + action_dim

    def linear(key, fan_in, fan_out):
        kw, kb = jax.random.split(key)
        bound = 1.0 / jnp.sqrt(float(fan_in))
        w = jax.random.uniform(kw, (fan_in, fan_out), jnp.float32, -bound, bound)
        b = jax.random.uniform(kb, (1, fan_out), jnp.float32, -bound, bound)
        return w, b

    keys = jax.random.split(key, 6)
    w1, b1 = linear(keys[0], sa_dim, HIDDEN)
    w2, b2 = linear(keys[1], HIDDEN, HIDDEN)
    w3, b3 = linear(keys[2], HIDDEN, 1)
    w4, b4 = linear(keys[3], sa_dim, HIDDEN)
    w5, b5 = linear(keys[4], HIDDEN, HIDDEN)
    w6, b6 = linear(keys[5], HIDDEN, 1)
    return dict(w1=w1, b1=b1, w2=w2, b2=b2, w3=w3, b3=b3,
                w4=w4, b4=b4, w5=w5, b5=b5, w6=w6, b6=b6)


def pack_params(raw):
    """Pack per-layer params into the fused kernel layout."""
    # fused layer-1: w1||w4 -> (S+A, 512) bf16, bias (1, 512) f32
    w14 = jnp.concatenate([raw["w1"], raw["w4"]], axis=1).astype(jnp.bfloat16)
    b14 = jnp.concatenate([raw["b1"], raw["b4"]], axis=1)

    w2 = raw["w2"].astype(jnp.bfloat16)
    w5 = raw["w5"].astype(jnp.bfloat16)
    b2 = raw["b2"]
    b5 = raw["b5"]

    # layer-3 as f32 rows for the VPU/XLU path (no MXU, full f32 precision)
    w3_row = raw["w3"].reshape(1, HIDDEN)    # (1, 256) f32
    w6_row = raw["w6"].reshape(1, HIDDEN)    # (1, 256) f32
    b36 = jnp.concatenate([raw["b3"], raw["b6"]], axis=1)  # (1, 2) f32

    return dict(w14=w14, b14=b14, w2=w2, b2=b2, w5=w5, b5=b5,
                w3_row=w3_row, w6_row=w6_row, b36=b36)


def critic_forward_ref(state, action, params):
    """Plain-JAX reference with the same bf16/f32 numerics as the kernel."""
    sa = jnp.concatenate([state, action], axis=1).astype(jnp.bfloat16)
    hg = jnp.dot(sa, params["w14"], preferred_element_type=jnp.float32) + params["b14"]
    hg = jnp.maximum(hg, 0.0)
    h = hg[:, :HIDDEN].astype(jnp.bfloat16)
    g = hg[:, HIDDEN:].astype(jnp.bfloat16)
    h = jnp.maximum(
        jnp.dot(h, params["w2"], preferred_element_type=jnp.float32) + params["b2"], 0.0)
    g = jnp.maximum(
        jnp.dot(g, params["w5"], preferred_element_type=jnp.float32) + params["b5"], 0.0)
    q1 = jnp.sum(h * params["w3_row"], axis=-1, keepdims=True) + params["b36"][:, 0:1]
    q2 = jnp.sum(g * params["w6_row"], axis=-1, keepdims=True) + params["b36"][:, 1:2]
    return q1, q2


if __name__ == "__main__":
    B, STATE_DIM, ACTION_DIM = 2, 12, 4

    key = jax.random.PRNGKey(0)
    k_params, k_state, k_action = jax.random.split(key, 3)

    raw = init_params(k_params, STATE_DIM, ACTION_DIM)
    params = pack_params(raw)

    state = jax.random.normal(k_state, (B, STATE_DIM), jnp.float32)
    action = jax.random.normal(k_action, (B, ACTION_DIM), jnp.float32)

    q1, q2 = jax.jit(critic_forward)(state, action, params)
    q1, q2 = jax.block_until_ready((q1, q2))

    # Correctness: plain-JAX reference with identical bf16/f32 numerics.
    # (vs. the f32 torch Critic the bf16 MXU path introduces ~1e-2-level
    #  relative error in Q values, acceptable for TD3.)
    q1_ref, q2_ref = critic_forward_ref(state, action, params)
    assert q1.shape == (B, 1) and q2.shape == (B, 1)
    assert jnp.allclose(q1, q1_ref, atol=1e-4, rtol=1e-4), (q1, q1_ref)
    assert jnp.allclose(q2, q2_ref, atol=1e-4, rtol=1e-4), (q2, q2_ref)

    print("KERNEL_OK")
</pallas_src>

<mosaic_0001>
module attributes {stable_mosaic.version = 11 : i64} {
  func.func @_critic_kernel(%arg0: i32, %arg1: memref<8x16xbf16, #tpu.memory_space<vmem>>, %arg2: memref<16x512xbf16, #tpu.memory_space<vmem>>, %arg3: memref<1x512xf32, #tpu.memory_space<vmem>>, %arg4: memref<256x256xbf16, #tpu.memory_space<vmem>>, %arg5: memref<1x256xf32, #tpu.memory_space<vmem>>, %arg6: memref<256x256xbf16, #tpu.memory_space<vmem>>, %arg7: memref<1x256xf32, #tpu.memory_space<vmem>>, %arg8: memref<1x256xf32, #tpu.memory_space<vmem>>, %arg9: memref<1x256xf32, #tpu.memory_space<vmem>>, %arg10: memref<1x2xf32, #tpu.memory_space<vmem>>, %arg11: memref<8x2xf32, #tpu.memory_space<vmem>>) attributes {dimension_semantics = [#tpu.dimension_semantics<parallel>], iteration_bounds = array<i64: 1>, scalar_prefetch = 0 : i64, scratch_operands = 0 : i64, tpu.core_type = #tpu.core_type<tc>, window_params = [{transform_indices = @transform_0, window_bounds = array<i64: 8, 16>}, {pipeline_mode = #tpu.pipeline_mode<synchronous>, transform_indices = @transform_1, window_bounds = array<i64: 16, 512>}, {pipeline_mode = #tpu.pipeline_mode<synchronous>, transform_indices = @transform_2, window_bounds = array<i64: 1, 512>}, {pipeline_mode = #tpu.pipeline_mode<synchronous>, transform_indices = @transform_3, window_bounds = array<i64: 256, 256>}, {pipeline_mode = #tpu.pipeline_mode<synchronous>, transform_indices = @transform_4, window_bounds = array<i64: 1, 256>}, {pipeline_mode = #tpu.pipeline_mode<synchronous>, transform_indices = @transform_5, window_bounds = array<i64: 256, 256>}, {pipeline_mode = #tpu.pipeline_mode<synchronous>, transform_indices = @transform_6, window_bounds = array<i64: 1, 256>}, {pipeline_mode = #tpu.pipeline_mode<synchronous>, transform_indices = @transform_7, window_bounds = array<i64: 1, 256>}, {pipeline_mode = #tpu.pipeline_mode<synchronous>, transform_indices = @transform_8, window_bounds = array<i64: 1, 256>}, {pipeline_mode = #tpu.pipeline_mode<synchronous>, transform_indices = @transform_9, window_bounds = array<i64: 1, 2>}, {transform_indices = @transform_10, window_bounds = array<i64: 8, 2>}]} {
    %c0 = arith.constant 0 : index
    %c0_0 = arith.constant 0 : index
    %0 = vector.load %arg1[%c0, %c0_0] : memref<8x16xbf16, #tpu.memory_space<vmem>>, vector<8x16xbf16>
    %c0_1 = arith.constant 0 : index
    %c0_2 = arith.constant 0 : index
    %1 = vector.load %arg2[%c0_1, %c0_2] : memref<16x512xbf16, #tpu.memory_space<vmem>>, vector<16x512xbf16>
    %cst = arith.constant dense<0.000000e+00> : vector<8x512xf32>
    %2 = tpu.matmul %0, %1, %cst {dimension_numbers = #tpu.dot_dimension_numbers<[1], [0], [0], [1], [0, 0, 1, 1], [], []>} : vector<8x16xbf16>, vector<16x512xbf16>, vector<8x512xf32> -> vector<8x512xf32>
    %c0_3 = arith.constant 0 : index
    %c0_4 = arith.constant 0 : index
    %3 = vector.load %arg3[%c0_3, %c0_4] : memref<1x512xf32, #tpu.memory_space<vmem>>, vector<1x512xf32>
    %4 = vector.broadcast %3 : vector<1x512xf32> to vector<8x512xf32>
    %5 = arith.addf %2, %4 : vector<8x512xf32>
    %cst_5 = arith.constant 0.000000e+00 : f32
    %6 = vector.broadcast %cst_5 : f32 to vector<8x512xf32>
    %7 = arith.maximumf %5, %6 : vector<8x512xf32>
    %8 = vector.extract_strided_slice %7 {offsets = [0, 0], sizes = [8, 256], strides = [1, 1]} : vector<8x512xf32> to vector<8x256xf32>
    %9 = arith.truncf %8 : vector<8x256xf32> to vector<8x256xbf16>
    %10 = vector.extract_strided_slice %7 {offsets = [0, 256], sizes = [8, 256], strides = [1, 1]} : vector<8x512xf32> to vector<8x256xf32>
    %11 = arith.truncf %10 : vector<8x256xf32> to vector<8x256xbf16>
    %c0_6 = arith.constant 0 : index
    %c0_7 = arith.constant 0 : index
    %12 = vector.load %arg4[%c0_6, %c0_7] : memref<256x256xbf16, #tpu.memory_space<vmem>>, vector<256x256xbf16>
    %cst_8 = arith.constant dense<0.000000e+00> : vector<8x256xf32>
    %13 = tpu.matmul %9, %12, %cst_8 {dimension_numbers = #tpu.dot_dimension_numbers<[1], [0], [0], [1], [0, 0, 1, 1], [], []>} : vector<8x256xbf16>, vector<256x256xbf16>, vector<8x256xf32> -> vector<8x256xf32>
    %c0_9 = arith.constant 0 : index
    %c0_10 = arith.constant 0 : index
    %14 = vector.load %arg5[%c0_9, %c0_10] : memref<1x256xf32, #tpu.memory_space<vmem>>, vector<1x256xf32>
    %15 = vector.broadcast %14 : vector<1x256xf32> to vector<8x256xf32>
    %16 = arith.addf %13, %15 : vector<8x256xf32>
    %cst_11 = arith.constant 0.000000e+00 : f32
    %17 = vector.broadcast %cst_11 : f32 to vector<8x256xf32>
    %18 = arith.maximumf %16, %17 : vector<8x256xf32>
    %c0_12 = arith.constant 0 : index
    %c0_13 = arith.constant 0 : index
    %19 = vector.load %arg6[%c0_12, %c0_13] : memref<256x256xbf16, #tpu.memory_space<vmem>>, vector<256x256xbf16>
    %cst_14 = arith.constant dense<0.000000e+00> : vector<8x256xf32>
    %20 = tpu.matmul %11, %19, %cst_14 {dimension_numbers = #tpu.dot_dimension_numbers<[1], [0], [0], [1], [0, 0, 1, 1], [], []>} : vector<8x256xbf16>, vector<256x256xbf16>, vector<8x256xf32> -> vector<8x256xf32>
    %c0_15 = arith.constant 0 : index
    %c0_16 = arith.constant 0 : index
    %21 = vector.load %arg7[%c0_15, %c0_16] : memref<1x256xf32, #tpu.memory_space<vmem>>, vector<1x256xf32>
    %22 = vector.broadcast %21 : vector<1x256xf32> to vector<8x256xf32>
    %23 = arith.addf %20, %22 : vector<8x256xf32>
    %cst_17 = arith.constant 0.000000e+00 : f32
    %24 = vector.broadcast %cst_17 : f32 to vector<8x256xf32>
    %25 = arith.maximumf %23, %24 : vector<8x256xf32>
    %c0_18 = arith.constant 0 : index
    %c0_19 = arith.constant 0 : index
    %26 = vector.load %arg8[%c0_18, %c0_19] : memref<1x256xf32, #tpu.memory_space<vmem>>, vector<1x256xf32>
    %27 = vector.broadcast %26 : vector<1x256xf32> to vector<8x256xf32>
    %28 = arith.mulf %18, %27 : vector<8x256xf32>
    %cst_20 = arith.constant dense<0.000000e+00> : vector<8xf32>
    %29 = vector.multi_reduction <add>, %28, %cst_20 [1] : vector<8x256xf32> to vector<8xf32>
    %30 = vector.shape_cast %29 : vector<8xf32> to vector<8x1xf32>
    %c0_21 = arith.constant 0 : index
    %c0_22 = arith.constant 0 : index
    %31 = vector.load %arg9[%c0_21, %c0_22] : memref<1x256xf32, #tpu.memory_space<vmem>>, vector<1x256xf32>
    %32 = vector.broadcast %31 : vector<1x256xf32> to vector<8x256xf32>
    %33 = arith.mulf %25, %32 : vector<8x256xf32>
    %cst_23 = arith.constant dense<0.000000e+00> : vector<8xf32>
    %34 = vector.multi_reduction <add>, %33, %cst_23 [1] : vector<8x256xf32> to vector<8xf32>
    %35 = vector.shape_cast %34 : vector<8xf32> to vector<8x1xf32>
    %36 = tpu.concatenate %30, %35 in 1 : vector<8x1xf32>, vector<8x1xf32> -> vector<8x2xf32>
    %c0_24 = arith.constant 0 : index
    %c0_25 = arith.constant 0 : index
    %37 = vector.load %arg10[%c0_24, %c0_25] : memref<1x2xf32, #tpu.memory_space<vmem>>, vector<1x2xf32>
    %38 = vector.broadcast %37 : vector<1x2xf32> to vector<8x2xf32>
    %39 = arith.addf %36, %38 : vector<8x2xf32>
    %c0_26 = arith.constant 0 : index
    %c0_27 = arith.constant 0 : index
    %40 = vector.load %arg11[%c0_26, %c0_27] : memref<8x2xf32, #tpu.memory_space<vmem>>, vector<8x2xf32>
    tpu.vector_store %arg11[%c0_26, %c0_27], %39 {strides = array<i32>} : memref<8x2xf32, #tpu.memory_space<vmem>>, vector<8x2xf32>,
    return
  }
  func.func @transform_0(%arg0: i32) -> (i32, i32) {
    %c0_i32 = arith.constant 0 : i32
    %c0_i32_0 = arith.constant 0 : i32
    return %arg0, %c0_i32 : i32, i32
  }
  func.func @transform_1(%arg0: i32) -> (i32, i32) {
    %c0_i32 = arith.constant 0 : i32
    %c0_i32_0 = arith.constant 0 : i32
    %c0_i32_1 = arith.constant 0 : i32
    return %c0_i32, %c0_i32_0 : i32, i32
  }
  func.func @transform_2(%arg0: i32) -> (i32, i32) {
    %c0_i32 = arith.constant 0 : i32
    %c0_i32_0 = arith.constant 0 : i32
    %c0_i32_1 = arith.constant 0 : i32
    return %c0_i32, %c0_i32_0 : i32, i32
  }
  func.func @transform_3(%arg0: i32) -> (i32, i32) {
    %c0_i32 = arith.constant 0 : i32
    %c0_i32_0 = arith.constant 0 : i32
    %c0_i32_1 = arith.constant 0 : i32
    return %c0_i32, %c0_i32_0 : i32, i32
  }
  func.func @transform_4(%arg0: i32) -> (i32, i32) {
    %c0_i32 = arith.constant 0 : i32
    %c0_i32_0 = arith.constant 0 : i32
    %c0_i32_1 = arith.constant 0 : i32
    return %c0_i32, %c0_i32_0 : i32, i32
  }
  func.func @transform_5(%arg0: i32) -> (i32, i32) {
    %c0_i32 = arith.constant 0 : i32
    %c0_i32_0 = arith.constant 0 : i32
    %c0_i32_1 = arith.constant 0 : i32
    return %c0_i32, %c0_i32_0 : i32, i32
  }
  func.func @transform_6(%arg0: i32) -> (i32, i32) {
    %c0_i32 = arith.constant 0 : i32
    %c0_i32_0 = arith.constant 0 : i32
    %c0_i32_1 = arith.constant 0 : i32
    return %c0_i32, %c0_i32_0 : i32, i32
  }
  func.func @transform_7(%arg0: i32) -> (i32, i32) {
    %c0_i32 = arith.constant 0 : i32
    %c0_i32_0 = arith.constant 0 : i32
    %c0_i32_1 = arith.constant 0 : i32
    return %c0_i32, %c0_i32_0 : i32, i32
  }
  func.func @transform_8(%arg0: i32) -> (i32, i32) {
    %c0_i32 = arith.constant 0 : i32
    %c0_i32_0 = arith.constant 0 : i32
    %c0_i32_1 = arith.constant 0 : i32
    return %c0_i32, %c0_i32_0 : i32, i32
  }
  func.func @transform_9(%arg0: i32) -> (i32, i32) {
    %c0_i32 = arith.constant 0 : i32
    %c0_i32_0 = arith.constant 0 : i32
    %c0_i32_1 = arith.constant 0 : i32
    return %c0_i32, %c0_i32_0 : i32, i32
  }
  func.func @transform_10(%arg0: i32) -> (i32, i32) {
    %c0_i32 = arith.constant 0 : i32
    %c0_i32_0 = arith.constant 0 : i32
    return %arg0, %c0_i32 : i32, i32
  }
}

</mosaic_0001>

<llo_original>
// kernel: critic_forward.1
$region0: #{critic_forward.1}
  #allocation0 [shape = 'u32[]', space=smem, size = 0x4, offset = 0x4, fixed_abs, tag = 'smem constant byte address 0x4 - core index']
  #allocation1 [shape = 'u32[144,128]{1,0:T(1,128)}', space=vmem, size = 0x12000, scoped, tag = 'internal scratch']
  %s0 = inlined_call_operand.vmem [shape: bf16[8,16], index: 0, kind: input, shape index: {}]
  %s1 = inlined_call_operand.vmem [shape: bf16[16,512], index: 1, kind: input, shape index: {}]
  %s2 = inlined_call_operand.vmem [shape: f32[1,512], index: 2, kind: input, shape index: {}]
  %s3 = inlined_call_operand.hbm [shape: bf16[256,256], index: 3, kind: input, shape index: {}]
  %s4 = inlined_call_operand.hbm [shape: f32[1,256], index: 4, kind: input, shape index: {}]
  %s5 = inlined_call_operand.hbm [shape: bf16[256,256], index: 5, kind: input, shape index: {}]
  %s6 = inlined_call_operand.hbm [shape: f32[1,256], index: 6, kind: input, shape index: {}]
  %s7 = inlined_call_operand.vmem [shape: f32[1,256], index: 7, kind: input, shape index: {}]
  %s8 = inlined_call_operand.vmem [shape: f32[1,256], index: 8, kind: input, shape index: {}]
  %s9 = inlined_call_operand.hbm [shape: f32[1,2], index: 9, kind: input, shape index: {}]
  %s10 = inlined_call_operand.vmem [shape: f32[8,2], index: 10, kind: output, shape index: {}]
  %s11 = sld [smem:[#allocation0]]
  $region70: #{critic_forward.1} parent=0
    _
  %s13 = ssub.s32 1, %s11
  %s14 = scalar_select 0, %s13, %s11
  $region1: #{critic_forward.1} parent=0
    #allocation2 [shape = 'u8[131072]{0}', space=vmem, size = 0x20000, scoped, tag = 'input window, operand 3, single buffered']
    #allocation3 [shape = 's32[1]{0}', space=sflag, size = 0x4, scoped, tag = 'scoped memory for critic_forward.1']
    #allocation4 [shape = 'u8[1024]{0}', space=vmem, size = 0x400, scoped, tag = 'input window, operand 4, single buffered']
    #allocation5 [shape = 's32[1]{0}', space=sflag, size = 0x4, scoped, tag = 'scoped memory for critic_forward.1']
    #allocation6 [shape = 'u8[131072]{0}', space=vmem, size = 0x20000, scoped, tag = 'input window, operand 5, single buffered']
    #allocation7 [shape = 'u8[1024]{0}', space=vmem, size = 0x400, scoped, tag = 'input window, operand 6, single buffered']
    #allocation8 [shape = 's32[1]{0}', space=sflag, size = 0x4, scoped, tag = 'scoped memory for critic_forward.1']
    #allocation9 [shape = 'u8[512]{0}', space=vmem, size = 0x400, scoped, tag = 'input window, operand 9, single buffered']
    %15 = vsyncpa [#allocation3], 0
    %16 = vsyncpa [#allocation5], 0
    %17 = vsyncpa [#allocation8], 0
    // Predicated region
    $region2: #{critic_forward.1} parent=1 // pred_check
      _
    $region3: #{critic_forward.1} parent=1 // pred_check_branch
      %19 = sbr.rel (0) target = $region5
    $region4: #{critic_forward.1} parent=1 // pred_region
      _
    $region5: #{critic_forward.1} parent=1 // pred_fallthru
      _
    // Predicated region
    $region6: #{critic_forward.1} parent=1 // pred_check
      _
    $region7: #{critic_forward.1} parent=1 // pred_check_branch
      %21 = sbr.rel (0) target = $region9
    $region8: #{critic_forward.1} parent=1 // pred_region
      _
    $region9: #{critic_forward.1} parent=1 // pred_fallthru
      _
    // Predicated region
    $region10: #{critic_forward.1} parent=1 // pred_check
      _
    $region11: #{critic_forward.1} parent=1 // pred_check_branch
      %23 = sbr.rel (0) target = $region13
    $region12: #{critic_forward.1} parent=1 // pred_region
      _
    $region13: #{critic_forward.1} parent=1 // pred_fallthru
      _
    // Predicated region
    $region14: #{critic_forward.1} parent=1 // pred_check
      _
    $region15: #{critic_forward.1} parent=1 // pred_check_branch
      %25 = sbr.rel (0) target = $region17
    $region16: #{critic_forward.1} parent=1 // pred_region
      %s27 = ssub.s32 4096, 4096
      %28 = vsyncadd [#allocation3], %s27
      %s29 = sshll.u32 [#allocation2], 4
      %s30 = int_to_ptr.vmem [resolvable:$true] %s29
      %35 = dma.hbm_to_vmem [thread:$0]  %s3, 4096, %s30, [#allocation3], 128, 128, 8
    $region17: #{critic_forward.1} parent=1 // pred_fallthru
      _
    // Predicated region
    $region18: #{critic_forward.1} parent=1 // pred_check
      _
    $region19: #{critic_forward.1} parent=1 // pred_check_branch
      %37 = sbr.rel (0) target = $region21
    $region20: #{critic_forward.1} parent=1 // pred_region
      %s39 = ssub.s32 32, 32
      %40 = vsyncadd [#allocation5], %s39
      %s42 = sshll.u32 [#allocation4], 4
      %s43 = int_to_ptr.vmem [resolvable:$true] %s42
      %45 = dma.hbm_to_vmem [thread:$0]  %s4, 32, %s43, [#allocation5]
    $region21: #{critic_forward.1} parent=1 // pred_fallthru
      _
    // Predicated region
    $region22: #{critic_forward.1} parent=1 // pred_check
      _
    $region23: #{critic_forward.1} parent=1 // pred_check_branch
      %47 = sbr.rel (0) target = $region25
    $region24: #{critic_forward.1} parent=1 // pred_region
      %s49 = ssub.s32 4096, 4096
      %50 = vsyncadd [#allocation5], %s49
      %s51 = sshll.u32 [#allocation6], 4
      %s52 = int_to_ptr.vmem [resolvable:$true] %s51
      %57 = dma.hbm_to_vmem [thread:$0]  %s5, 4096, %s52, [#allocation5], 128, 128, 8
    $region25: #{critic_forward.1} parent=1 // pred_fallthru
      _
    // Predicated region
    $region26: #{critic_forward.1} parent=1 // pred_check
      _
    $region27: #{critic_forward.1} parent=1 // pred_check_branch
      %59 = sbr.rel (0) target = $region29
    $region28: #{critic_forward.1} parent=1 // pred_region
      %s61 = ssub.s32 32, 32
      %62 = vsyncadd [#allocation8], %s61
      %s64 = sshll.u32 [#allocation7], 4
      %s65 = int_to_ptr.vmem [resolvable:$true] %s64
      %67 = dma.hbm_to_vmem [thread:$0]  %s6, 32, %s65, [#allocation8]
    $region29: #{critic_forward.1} parent=1 // pred_fallthru
      _
    // Predicated region
    $region30: #{critic_forward.1} parent=1 // pred_check
      _
    $region31: #{critic_forward.1} parent=1 // pred_check_branch
      %69 = sbr.rel (0) target = $region33
    $region32: #{critic_forward.1} parent=1 // pred_region
      _
    $region33: #{critic_forward.1} parent=1 // pred_fallthru
      _
    // Predicated region
    $region34: #{critic_forward.1} parent=1 // pred_check
      _
    $region35: #{critic_forward.1} parent=1 // pred_check_branch
      %71 = sbr.rel (0) target = $region37
    $region36: #{critic_forward.1} parent=1 // pred_region
      _
    $region37: #{critic_forward.1} parent=1 // pred_fallthru
      _
    // Predicated region
    $region38: #{critic_forward.1} parent=1 // pred_check
      _
    $region39: #{critic_forward.1} parent=1 // pred_check_branch
      %73 = sbr.rel (0) target = $region41
    $region40: #{critic_forward.1} parent=1 // pred_region
      %s75 = ssub.s32 16, 16
      %76 = vsyncadd [#allocation8], %s75
      %s78 = sshll.u32 [#allocation9], 4
      %s79 = int_to_ptr.vmem [resolvable:$true] %s78
      %81 = dma.hbm_to_vmem [thread:$0]  %s9, 16, %s79, [#allocation8]
    $region41: #{critic_forward.1} parent=1 // pred_fallthru
      _
    // Predicated region
    $region42: #{critic_forward.1} parent=1 // pred_check
      _
    $region43: #{critic_forward.1} parent=1 // pred_check_branch
      %83 = sbr.rel (0) target = $region45
    $region44: #{critic_forward.1} parent=1 // pred_region
      %84 = dma.done [#allocation3], 4096
    $region45: #{critic_forward.1} parent=1 // pred_fallthru
      _
    // Predicated region
    $region46: #{critic_forward.1} parent=1 // pred_check
      _
    $region47: #{critic_forward.1} parent=1 // pred_check_branch
      %86 = sbr.rel (0) target = $region49
    $region48: #{critic_forward.1} parent=1 // pred_region
      %87 = dma.done [#allocation5], 32
    $region49: #{critic_forward.1} parent=1 // pred_fallthru
      _
    // Predicated region
    $region50: #{critic_forward.1} parent=1 // pred_check
      _
    $region51: #{critic_forward.1} parent=1 // pred_check_branch
      %89 = sbr.rel (0) target = $region53
    $region52: #{critic_forward.1} parent=1 // pred_region
      %90 = dma.done [#allocation5], 4096
    $region53: #{critic_forward.1} parent=1 // pred_fallthru
      _
    // Predicated region
    $region54: #{critic_forward.1} parent=1 // pred_check
      _
    $region55: #{critic_forward.1} parent=1 // pred_check_branch
      %92 = sbr.rel (0) target = $region57
    $region56: #{critic_forward.1} parent=1 // pred_region
      %93 = dma.done [#allocation8], 32
    $region57: #{critic_forward.1} parent=1 // pred_fallthru
      _
    // Predicated region
    $region58: #{critic_forward.1} parent=1 // pred_check
      _
    $region59: #{critic_forward.1} parent=1 // pred_check_branch
      %95 = sbr.rel (0) target = $region61
    $region60: #{critic_forward.1} parent=1 // pred_region
      %96 = dma.done [#allocation8], 16
    $region61: #{critic_forward.1} parent=1 // pred_fallthru
      _
    %v98 = vld [vmem:[%s0] sm:$0xf]
    %v99 = vld [vmem:[%s1] sm:$0xff]
    %v100 = vld [vmem:[%s1 + $0x8] sm:$0xff]
    %v101 = vld [vmem:[%s1 + $0x10] sm:$0xff]
    %v102 = vld [vmem:[%s1 + $0x18] sm:$0xff]
    %v103 = vld [vmem:[%s2] sm:$0xf]
    %v105 = vlaneseq
    %v106 = vshrl.u32 %v105, 7
    %v107 = vsub.s32 0, %v106
    %v108 = vrot.slane %v103, %v107
    %v109 = vlaneseq
    %v110 = vshrl.u32 %v109, 7
    %v111 = vsub.s32 1, %v110
    %v112 = vrot.slane %v103, %v111
    %v113 = vlaneseq
    %v114 = vshrl.u32 %v113, 7
    %v115 = vsub.s32 2, %v114
    %v116 = vrot.slane %v103, %v115
    %v117 = vlaneseq
    %v118 = vshrl.u32 %v117, 7
    %v119 = vsub.s32 3, %v118
    %v120 = vrot.slane %v103, %v119
    %v129 = vunpack.c.l.b16 %v99
    %v130 = vunpack.c.h.b16 %v99
    %v131 = vunpack.c.l.b16 %v100
    %v132 = vunpack.c.h.b16 %v100
    %v133 = vunpack.c.l.b16 %v101
    %v134 = vunpack.c.h.b16 %v101
    %v135 = vunpack.c.l.b16 %v102
    %v136 = vunpack.c.h.b16 %v102
    %v137 = vpack.c.b16 %v133, %v129
    %v138 = vpack.c.b16 %v134, %v130
    %v139 = vpack.c.b16 %v135, %v131
    %v140 = vpack.c.b16 %v136, %v132
    %vm145 = vcmask 130048
    %v147 = vsel %vm145, %v98, 0
    %149 = vmatprep.subr.bf16.mxu0 %v138
    %150 = vmatpush1.bf16.msra.mxu0 %v137
    %151 = vmatprep.subr.bf16.mxu0 0
    %152 = vmatpush1.bf16.msra.mxu0 0
    %153 = vmatprep.subr.bf16.mxu0 0
    %154 = vmatpush1.bf16.msra.mxu0 0
    %155 = vmatprep.subr.bf16.mxu0 0
    %156 = vmatpush1.bf16.msra.mxu0 0
    %157 = vmatprep.subr.bf16.mxu0 0
    %158 = vmatpush1.bf16.msra.mxu0 0
    %159 = vmatprep.subr.bf16.mxu0 0
    %160 = vmatpush1.bf16.msra.mxu0 0
    %161 = vmatprep.subr.bf16.mxu0 0
    %162 = vmatpush1.bf16.msra.mxu0 0
    %163 = vmatprep.subr.bf16.mxu0 0
    %164 = vmatpush1.bf16.msra.mxu0 0
    %165 = vmatprep.subr.bf16.mxu0 0
    %166 = vmatpush1.bf16.msra.mxu0 0
    %167 = vmatprep.subr.bf16.mxu0 0
    %168 = vmatpush1.bf16.msra.mxu0 0
    %169 = vmatprep.subr.bf16.mxu0 0
    %170 = vmatpush1.bf16.msra.mxu0 0
    %171 = vmatprep.subr.bf16.mxu0 0
    %172 = vmatpush1.bf16.msra.mxu0 0
    %173 = vmatprep.subr.bf16.mxu0 0
    %174 = vmatpush1.bf16.msra.mxu0 0
    %175 = vmatprep.subr.bf16.mxu0 0
    %176 = vmatpush1.bf16.msra.mxu0 0
    %177 = vmatprep.subr.bf16.mxu0 0
    %178 = vmatpush1.bf16.msra.mxu0 0
    %179 = vmatprep.subr.bf16.mxu0 0
    %180 = vmatpush1.bf16.msra.mxu0 0
    %181 = vmatprep.mubr.bf16.mxu0 0
    %182 = vmatmul.mubr.bf16.gmra.mrb[0].mxu0 %v147
    %v183 = vpop.f32.mrb[0].mxu0
    %v184 = vadd.f32 %v108, %v183
    %v185 = vpop.f32.mrb[0].mxu0
    %v186 = vadd.f32 %v112, %v185
    %v187 = vpop.f32.mrb[0].mxu0
    %v188 = vpop.f32.mrb[0].mxu0
    %189 = vdwg.mxu0
    %190 = vmatprep.subr.bf16.mxu0 %v140
    %191 = vmatpush1.bf16.msra.mxu0 %v139
    %192 = vmatprep.subr.bf16.mxu0 0
    %193 = vmatpush1.bf16.msra.mxu0 0
    %194 = vmatprep.subr.bf16.mxu0 0
    %195 = vmatpush1.bf16.msra.mxu0 0
    %196 = vmatprep.subr.bf16.mxu0 0
    %197 = vmatpush1.bf16.msra.mxu0 0
    %198 = vmatprep.subr.bf16.mxu0 0
    %199 = vmatpush1.bf16.msra.mxu0 0
    %200 = vmatprep.subr.bf16.mxu0 0
    %201 = vmatpush1.bf16.msra.mxu0 0
    %202 = vmatprep.subr.bf16.mxu0 0
    %203 = vmatpush1.bf16.msra.mxu0 0
    %204 = vmatprep.subr.bf16.mxu0 0
    %205 = vmatpush1.bf16.msra.mxu0 0
    %206 = vmatprep.subr.bf16.mxu0 0
    %207 = vmatpush1.bf16.msra.mxu0 0
    %208 = vmatprep.subr.bf16.mxu0 0
    %209 = vmatpush1.bf16.msra.mxu0 0
    %210 = vmatprep.subr.bf16.mxu0 0
    %211 = vmatpush1.bf16.msra.mxu0 0
    %212 = vmatprep.subr.bf16.mxu0 0
    %213 = vmatpush1.bf16.msra.mxu0 0
    %214 = vmatprep.subr.bf16.mxu0 0
    %215 = vmatpush1.bf16.msra.mxu0 0
    %216 = vmatprep.subr.bf16.mxu0 0
    %217 = vmatpush1.bf16.msra.mxu0 0
    %218 = vmatprep.subr.bf16.mxu0 0
    %219 = vmatpush1.bf16.msra.mxu0 0
    %220 = vmatprep.subr.bf16.mxu0 0
    %221 = vmatpush1.bf16.msra.mxu0 0
    %222 = vmatprep.mubr.bf16.mxu0 0
    %223 = vmatmul.mubr.bf16.gmra.mrb[0].mxu0 %v147
    %v224 = vpop.f32.mrb[0].mxu0
    %v225 = vadd.f32 %v116, %v224
    %v226 = vpop.f32.mrb[0].mxu0
    %v227 = vadd.f32 %v120, %v226
    %v228 = vpop.f32.mrb[0].mxu0
    %v229 = vpop.f32.mrb[0].mxu0
    %230 = vdwg.mxu0
    %v231 = vmax.f32 %v184, 0.0
    %v232 = vmax.f32 %v186, 0.0
    %v233 = vmax.f32 %v225, 0.0
    %v234 = vmax.f32 %v227, 0.0
    %v235 = vpack.c.bf16 %v231, %v231
    %v236 = vpack.c.bf16 %v232, %v232
    %v237 = vpack.c.bf16 %v233, %v233
    %v238 = vpack.c.bf16 %v234, %v234
    %v239 = vld [vmem:[#allocation2] sm:$0xff]
    %v240 = vld [vmem:[#allocation2 + $0x8] sm:$0xff]
    %v241 = vld [vmem:[#allocation2 + $0x10] sm:$0xff]
    %v242 = vld [vmem:[#allocation2 + $0x18] sm:$0xff]
    %v243 = vld [vmem:[#allocation2 + $0x20] sm:$0xff]
    %v244 = vld [vmem:[#allocation2 + $0x28] sm:$0xff]
    %v245 = vld [vmem:[#allocation2 + $0x30] sm:$0xff]
    %v246 = vld [vmem:[#allocation2 + $0x38] sm:$0xff]
    %v247 = vld [vmem:[#allocation2 + $0x40] sm:$0xff]
    %v248 = vld [vmem:[#allocation2 + $0x48] sm:$0xff]
    %v249 = vld [vmem:[#allocation2 + $0x50] sm:$0xff]
    %v250 = vld [vmem:[#allocation2 + $0x58] sm:$0xff]
    %v251 = vld [vmem:[#allocation2 + $0x60] sm:$0xff]
    %v252 = vld [vmem:[#allocation2 + $0x68] sm:$0xff]
    %v253 = vld [vmem:[#allocation2 + $0x70] sm:$0xff]
    %v254 = vld [vmem:[#allocation2 + $0x78] sm:$0xff]
    %v255 = vld [vmem:[#allocation2 + $0x80] sm:$0xff]
    %v256 = vld [vmem:[#allocation2 + $0x88] sm:$0xff]
    %v257 = vld [vmem:[#allocation2 + $0x90] sm:$0xff]
    %v258 = vld [vmem:[#allocation2 + $0x98] sm:$0xff]
    %v259 = vld [vmem:[#allocation2 + $0xa0] sm:$0xff]
    %v260 = vld [vmem:[#allocation2 + $0xa8] sm:$0xff]
    %v261 = vld [vmem:[#allocation2 + $0xb0] sm:$0xff]
    %v262 = vld [vmem:[#allocation2 + $0xb8] sm:$0xff]
    %v263 = vld [vmem:[#allocation2 + $0xc0] sm:$0xff]
    %v264 = vld [vmem:[#allocation2 + $0xc8] sm:$0xff]
    %v265 = vld [vmem:[#allocation2 + $0xd0] sm:$0xff]
    %v266 = vld [vmem:[#allocation2 + $0xd8] sm:$0xff]
    %v267 = vld [vmem:[#allocation2 + $0xe0] sm:$0xff]
    %v268 = vld [vmem:[#allocation2 + $0xe8] sm:$0xff]
    %v269 = vld [vmem:[#allocation2 + $0xf0] sm:$0xff]
    %v270 = vld [vmem:[#allocation2 + $0xf8] sm:$0xff]
    %v271 = vld [vmem:[#allocation4] sm:$0x3]
    %v273 = vlaneseq
    %v274 = vshrl.u32 %v273, 7
    %v275 = vsub.s32 0, %v274
    %v276 = vrot.slane %v271, %v275
    %v277 = vlaneseq
    %v278 = vshrl.u32 %v277, 7
    %v279 = vsub.s32 1, %v278
    %v280 = vrot.slane %v271, %v279
    %v315 = vunpack.c.l.b16 %v239
    %v316 = vunpack.c.h.b16 %v239
    %v317 = vunpack.c.l.b16 %v240
    %v318 = vunpack.c.h.b16 %v240
    %v319 = vunpack.c.l.b16 %v241
    %v320 = vunpack.c.h.b16 %v241
    %v321 = vunpack.c.l.b16 %v242
    %v322 = vunpack.c.h.b16 %v242
    %v323 = vunpack.c.l.b16 %v243
    %v324 = vunpack.c.h.b16 %v243
    %v325 = vunpack.c.l.b16 %v244
    %v326 = vunpack.c.h.b16 %v244
    %v327 = vunpack.c.l.b16 %v245
    %v328 = vunpack.c.h.b16 %v245
    %v329 = vunpack.c.l.b16 %v246
    %v330 = vunpack.c.h.b16 %v246
    %v331 = vunpack.c.l.b16 %v247
    %v332 = vunpack.c.h.b16 %v247
    %v333 = vunpack.c.l.b16 %v248
    %v334 = vunpack.c.h.b16 %v248
    %v335 = vunpack.c.l.b16 %v249
    %v336 = vunpack.c.h.b16 %v249
    %v337 = vunpack.c.l.b16 %v250
    %v338 = vunpack.c.h.b16 %v250
    %v339 = vunpack.c.l.b16 %v251
    %v340 = vunpack.c.h.b16 %v251
    %v341 = vunpack.c.l.b16 %v252
    %v342 = vunpack.c.h.b16 %v252
    %v343 = vunpack.c.l.b16 %v253
    %v344 = vunpack.c.h.b16 %v253
    %v345 = vunpack.c.l.b16 %v254
    %v346 = vunpack.c.h.b16 %v254
    %v347 = vunpack.c.l.b16 %v255
    %v348 = vunpack.c.h.b16 %v255
    %v349 = vunpack.c.l.b16 %v256
    %v350 = vunpack.c.h.b16 %v256
    %v351 = vunpack.c.l.b16 %v257
    %v352 = vunpack.c.h.b16 %v257
    %v353 = vunpack.c.l.b16 %v258
    %v354 = vunpack.c.h.b16 %v258
    %v355 = vunpack.c.l.b16 %v259
    %v356 = vunpack.c.h.b16 %v259
    %v357 = vunpack.c.l.b16 %v260
    %v358 = vunpack.c.h.b16 %v260
    %v359 = vunpack.c.l.b16 %v261
    %v360 = vunpack.c.h.b16 %v261
    %v361 = vunpack.c.l.b16 %v262
    %v362 = vunpack.c.h.b16 %v262
    %v363 = vunpack.c.l.b16 %v263
    %v364 = vunpack.c.h.b16 %v263
    %v365 = vunpack.c.l.b16 %v264
    %v366 = vunpack.c.h.b16 %v264
    %v367 = vunpack.c.l.b16 %v265
    %v368 = vunpack.c.h.b16 %v265
    %v369 = vunpack.c.l.b16 %v266
    %v370 = vunpack.c.h.b16 %v266
    %v371 = vunpack.c.l.b16 %v267
    %v372 = vunpack.c.h.b16 %v267
    %v373 = vunpack.c.l.b16 %v268
    %v374 = vunpack.c.h.b16 %v268
    %v375 = vunpack.c.l.b16 %v269
    %v376 = vunpack.c.h.b16 %v269
    %v377 = vunpack.c.l.b16 %v270
    %v378 = vunpack.c.h.b16 %v270
    %v379 = vpack.c.b16 %v317, %v315
    %v380 = vpack.c.b16 %v318, %v316
    %v381 = vpack.c.b16 %v321, %v319
    %v382 = vpack.c.b16 %v322, %v320
    %v383 = vpack.c.b16 %v325, %v323
    %v384 = vpack.c.b16 %v326, %v324
    %v385 = vpack.c.b16 %v329, %v327
    %v386 = vpack.c.b16 %v330, %v328
    %v387 = vpack.c.b16 %v333, %v331
    %v388 = vpack.c.b16 %v334, %v332
    %v389 = vpack.c.b16 %v337, %v335
    %v390 = vpack.c.b16 %v338, %v336
    %v391 = vpack.c.b16 %v341, %v339
    %v392 = vpack.c.b16 %v342, %v340
    %v393 = vpack.c.b16 %v345, %v343
    %v394 = vpack.c.b16 %v346, %v344
    %v395 = vpack.c.b16 %v349, %v347
    %v396 = vpack.c.b16 %v350, %v348
    %v397 = vpack.c.b16 %v353, %v351
    %v398 = vpack.c.b16 %v354, %v352
    %v399 = vpack.c.b16 %v357, %v355
    %v400 = vpack.c.b16 %v358, %v356
    %v401 = vpack.c.b16 %v361, %v359
    %v402 = vpack.c.b16 %v362, %v360
    %v403 = vpack.c.b16 %v365, %v363
    %v404 = vpack.c.b16 %v366, %v364
    %v405 = vpack.c.b16 %v369, %v367
    %v406 = vpack.c.b16 %v370, %v368
    %v407 = vpack.c.b16 %v373, %v371
    %v408 = vpack.c.b16 %v374, %v372
    %v409 = vpack.c.b16 %v377, %v375
    %v410 = vpack.c.b16 %v378, %v376
    %443 = vmatprep.subr.bf16.mxu0 %v380
    %444 = vmatpush1.bf16.msra.mxu0 %v379
    %445 = vmatprep.subr.bf16.mxu0 %v382
    %446 = vmatpush1.bf16.msra.mxu0 %v381
    %447 = vmatprep.subr.bf16.mxu0 %v384
    %448 = vmatpush1.bf16.msra.mxu0 %v383
    %449 = vmatprep.subr.bf16.mxu0 %v386
    %450 = vmatpush1.bf16.msra.mxu0 %v385
    %451 = vmatprep.subr.bf16.mxu0 %v388
    %452 = vmatpush1.bf16.msra.mxu0 %v387
    %453 = vmatprep.subr.bf16.mxu0 %v390
    %454 = vmatpush1.bf16.msra.mxu0 %v389
    %455 = vmatprep.subr.bf16.mxu0 %v392
    %456 = vmatpush1.bf16.msra.mxu0 %v391
    %457 = vmatprep.subr.bf16.mxu0 %v394
    %458 = vmatpush1.bf16.msra.mxu0 %v393
    %459 = vmatprep.subr.bf16.mxu0 %v396
    %460 = vmatpush1.bf16.msra.mxu0 %v395
    %461 = vmatprep.subr.bf16.mxu0 %v398
    %462 = vmatpush1.bf16.msra.mxu0 %v397
    %463 = vmatprep.subr.bf16.mxu0 %v400
    %464 = vmatpush1.bf16.msra.mxu0 %v399
    %465 = vmatprep.subr.bf16.mxu0 %v402
    %466 = vmatpush1.bf16.msra.mxu0 %v401
    %467 = vmatprep.subr.bf16.mxu0 %v404
    %468 = vmatpush1.bf16.msra.mxu0 %v403
    %469 = vmatprep.subr.bf16.mxu0 %v406
    %470 = vmatpush1.bf16.msra.mxu0 %v405
    %471 = vmatprep.subr.bf16.mxu0 %v408
    %472 = vmatpush1.bf16.msra.mxu0 %v407
    %473 = vmatprep.subr.bf16.mxu0 %v410
    %474 = vmatpush1.bf16.msra.mxu0 %v409
    %475 = vmatprep.mubr.bf16.mxu0 %v236
    %476 = vmatmul.mubr.bf16.gmra.mrb[0].mxu0 %v235
    %v477 = vpop.f32.mrb[0].mxu0
    %v478 = vadd.f32 %v276, %v477
    %v479 = vpop.f32.mrb[0].mxu0
    %v480 = vadd.f32 %v280, %v479
    %v481 = vpop.f32.mrb[0].mxu0
    %v482 = vpop.f32.mrb[0].mxu0
    %483 = vdwg.mxu0
    %v484 = vmax.f32 %v478, 0.0
    %v485 = vmax.f32 %v480, 0.0
    %v486 = vld [vmem:[#allocation6] sm:$0xff]
    %v487 = vld [vmem:[#allocation6 + $0x8] sm:$0xff]
    %v488 = vld [vmem:[#allocation6 + $0x10] sm:$0xff]
    %v489 = vld [vmem:[#allocation6 + $0x18] sm:$0xff]
    %v490 = vld [vmem:[#allocation6 + $0x20] sm:$0xff]
    %v491 = vld [vmem:[#allocation6 + $0x28] sm:$0xff]
    %v492 = vld [vmem:[#allocation6 + $0x30] sm:$0xff]
    %v493 = vld [vmem:[#allocation6 + $0x38] sm:$0xff]
    %v494 = vld [vmem:[#allocation6 + $0x40] sm:$0xff]
    %v495 = vld [vmem:[#allocation6 + $0x48] sm:$0xff]
    %v496 = vld [vmem:[#allocation6 + $0x50] sm:$0xff]
    %v497 = vld [vmem:[#allocation6 + $0x58] sm:$0xff]
    %v498 = vld [vmem:[#allocation6 + $0x60] sm:$0xff]
    %v499 = vld [vmem:[#allocation6 + $0x68] sm:$0xff]
    %v500 = vld [vmem:[#allocation6 + $0x70] sm:$0xff]
    %v501 = vld [vmem:[#allocation6 + $0x78] sm:$0xff]
    %v502 = vld [vmem:[#allocation6 + $0x80] sm:$0xff]
    %v503 = vld [vmem:[#allocation6 + $0x88] sm:$0xff]
    %v504 = vld [vmem:[#allocation6 + $0x90] sm:$0xff]
    %v505 = vld [vmem:[#allocation6 + $0x98] sm:$0xff]
    %v506 = vld [vmem:[#allocation6 + $0xa0] sm:$0xff]
    %v507 = vld [vmem:[#allocation6 + $0xa8] sm:$0xff]
    %v508 = vld [vmem:[#allocation6 + $0xb0] sm:$0xff]
    %v509 = vld [vmem:[#allocation6 + $0xb8] sm:$0xff]
    %v510 = vld [vmem:[#allocation6 + $0xc0] sm:$0xff]
    %v511 = vld [vmem:[#allocation6 + $0xc8] sm:$0xff]
    %v512 = vld [vmem:[#allocation6 + $0xd0] sm:$0xff]
    %v513 = vld [vmem:[#allocation6 + $0xd8] sm:$0xff]
    %v514 = vld [vmem:[#allocation6 + $0xe0] sm:$0xff]
    %v515 = vld [vmem:[#allocation6 + $0xe8] sm:$0xff]
    %v516 = vld [vmem:[#allocation6 + $0xf0] sm:$0xff]
    %v517 = vld [vmem:[#allocation6 + $0xf8] sm:$0xff]
    %v518 = vld [vmem:[#allocation7] sm:$0x3]
    %v520 = vlaneseq
    %v521 = vshrl.u32 %v520, 7
    %v522 = vsub.s32 0, %v521
    %v523 = vrot.slane %v518, %v522
    %v524 = vlaneseq
    %v525 = vshrl.u32 %v524, 7
    %v526 = vsub.s32 1, %v525
    %v527 = vrot.slane %v518, %v526
    %v562 = vunpack.c.l.b16 %v486
    %v563 = vunpack.c.h.b16 %v486
    %v564 = vunpack.c.l.b16 %v487
    %v565 = vunpack.c.h.b16 %v487
    %v566 = vunpack.c.l.b16 %v488
    %v567 = vunpack.c.h.b16 %v488
    %v568 = vunpack.c.l.b16 %v489
    %v569 = vunpack.c.h.b16 %v489
    %v570 = vunpack.c.l.b16 %v490
    %v571 = vunpack.c.h.b16 %v490
    %v572 = vunpack.c.l.b16 %v491
    %v573 = vunpack.c.h.b16 %v491
    %v574 = vunpack.c.l.b16 %v492
    %v575 = vunpack.c.h.b16 %v492
    %v576 = vunpack.c.l.b16 %v493
    %v577 = vunpack.c.h.b16 %v493
    %v578 = vunpack.c.l.b16 %v494
    %v579 = vunpack.c.h.b16 %v494
    %v580 = vunpack.c.l.b16 %v495
    %v581 = vunpack.c.h.b16 %v495
    %v582 = vunpack.c.l.b16 %v496
    %v583 = vunpack.c.h.b16 %v496
    %v584 = vunpack.c.l.b16 %v497
    %v585 = vunpack.c.h.b16 %v497
    %v586 = vunpack.c.l.b16 %v498
    %v587 = vunpack.c.h.b16 %v498
    %v588 = vunpack.c.l.b16 %v499
    %v589 = vunpack.c.h.b16 %v499
    %v590 = vunpack.c.l.b16 %v500
    %v591 = vunpack.c.h.b16 %v500
    %v592 = vunpack.c.l.b16 %v501
    %v593 = vunpack.c.h.b16 %v501
    %v594 = vunpack.c.l.b16 %v502
    %v595 = vunpack.c.h.b16 %v502
    %v596 = vunpack.c.l.b16 %v503
    %v597 = vunpack.c.h.b16 %v503
    %v598 = vunpack.c.l.b16 %v504
    %v599 = vunpack.c.h.b16 %v504
    %v600 = vunpack.c.l.b16 %v505
    %v601 = vunpack.c.h.b16 %v505
    %v602 = vunpack.c.l.b16 %v506
    %v603 = vunpack.c.h.b16 %v506
    %v604 = vunpack.c.l.b16 %v507
    %v605 = vunpack.c.h.b16 %v507
    %v606 = vunpack.c.l.b16 %v508
    %v607 = vunpack.c.h.b16 %v508
    %v608 = vunpack.c.l.b16 %v509
    %v609 = vunpack.c.h.b16 %v509
    %v610 = vunpack.c.l.b16 %v510
    %v611 = vunpack.c.h.b16 %v510
    %v612 = vunpack.c.l.b16 %v511
    %v613 = vunpack.c.h.b16 %v511
    %v614 = vunpack.c.l.b16 %v512
    %v615 = vunpack.c.h.b16 %v512
    %v616 = vunpack.c.l.b16 %v513
    %v617 = vunpack.c.h.b16 %v513
    %v618 = vunpack.c.l.b16 %v514
    %v619 = vunpack.c.h.b16 %v514
    %v620 = vunpack.c.l.b16 %v515
    %v621 = vunpack.c.h.b16 %v515
    %v622 = vunpack.c.l.b16 %v516
    %v623 = vunpack.c.h.b16 %v516
    %v624 = vunpack.c.l.b16 %v517
    %v625 = vunpack.c.h.b16 %v517
    %v626 = vpack.c.b16 %v564, %v562
    %v627 = vpack.c.b16 %v565, %v563
    %v628 = vpack.c.b16 %v568, %v566
    %v629 = vpack.c.b16 %v569, %v567
    %v630 = vpack.c.b16 %v572, %v570
    %v631 = vpack.c.b16 %v573, %v571
    %v632 = vpack.c.b16 %v576, %v574
    %v633 = vpack.c.b16 %v577, %v575
    %v634 = vpack.c.b16 %v580, %v578
    %v635 = vpack.c.b16 %v581, %v579
    %v636 = vpack.c.b16 %v584, %v582
    %v637 = vpack.c.b16 %v585, %v583
    %v638 = vpack.c.b16 %v588, %v586
    %v639 = vpack.c.b16 %v589, %v587
    %v640 = vpack.c.b16 %v592, %v590
    %v641 = vpack.c.b16 %v593, %v591
    %v642 = vpack.c.b16 %v596, %v594
    %v643 = vpack.c.b16 %v597, %v595
    %v644 = vpack.c.b16 %v600, %v598
    %v645 = vpack.c.b16 %v601, %v599
    %v646 = vpack.c.b16 %v604, %v602
    %v647 = vpack.c.b16 %v605, %v603
    %v648 = vpack.c.b16 %v608, %v606
    %v649 = vpack.c.b16 %v609, %v607
    %v650 = vpack.c.b16 %v612, %v610
    %v651 = vpack.c.b16 %v613, %v611
    %v652 = vpack.c.b16 %v616, %v614
    %v653 = vpack.c.b16 %v617, %v615
    %v654 = vpack.c.b16 %v620, %v618
    %v655 = vpack.c.b16 %v621, %v619
    %v656 = vpack.c.b16 %v624, %v622
    %v657 = vpack.c.b16 %v625, %v623
    %690 = vmatprep.subr.bf16.mxu0 %v627
    %691 = vmatpush1.bf16.msra.mxu0 %v626
    %692 = vmatprep.subr.bf16.mxu0 %v629
    %693 = vmatpush1.bf16.msra.mxu0 %v628
    %694 = vmatprep.subr.bf16.mxu0 %v631
    %695 = vmatpush1.bf16.msra.mxu0 %v630
    %696 = vmatprep.subr.bf16.mxu0 %v633
    %697 = vmatpush1.bf16.msra.mxu0 %v632
    %698 = vmatprep.subr.bf16.mxu0 %v635
    %699 = vmatpush1.bf16.msra.mxu0 %v634
    %700 = vmatprep.subr.bf16.mxu0 %v637
    %701 = vmatpush1.bf16.msra.mxu0 %v636
    %702 = vmatprep.subr.bf16.mxu0 %v639
    %703 = vmatpush1.bf16.msra.mxu0 %v638
    %704 = vmatprep.subr.bf16.mxu0 %v641
    %705 = vmatpush1.bf16.msra.mxu0 %v640
    %706 = vmatprep.subr.bf16.mxu0 %v643
    %707 = vmatpush1.bf16.msra.mxu0 %v642
    %708 = vmatprep.subr.bf16.mxu0 %v645
    %709 = vmatpush1.bf16.msra.mxu0 %v644
    %710 = vmatprep.subr.bf16.mxu0 %v647
    %711 = vmatpush1.bf16.msra.mxu0 %v646
    %712 = vmatprep.subr.bf16.mxu0 %v649
    %713 = vmatpush1.bf16.msra.mxu0 %v648
    %714 = vmatprep.subr.bf16.mxu0 %v651
    %715 = vmatpush1.bf16.msra.mxu0 %v650
    %716 = vmatprep.subr.bf16.mxu0 %v653
    %717 = vmatpush1.bf16.msra.mxu0 %v652
    %718 = vmatprep.subr.bf16.mxu0 %v655
    %719 = vmatpush1.bf16.msra.mxu0 %v654
    %720 = vmatprep.subr.bf16.mxu0 %v657
    %721 = vmatpush1.bf16.msra.mxu0 %v656
    %722 = vmatprep.mubr.bf16.mxu0 %v238
    %723 = vmatmul.mubr.bf16.gmra.mrb[0].mxu0 %v237
    %v724 = vpop.f32.mrb[0].mxu0
    %v725 = vadd.f32 %v523, %v724
    %v726 = vpop.f32.mrb[0].mxu0
    %v727 = vadd.f32 %v527, %v726
    %v728 = vpop.f32.mrb[0].mxu0
    %v729 = vpop.f32.mrb[0].mxu0
    %730 = vdwg.mxu0
    %v731 = vmax.f32 %v725, 0.0
    %v732 = vmax.f32 %v727, 0.0
    %v733 = vld [vmem:[%s7] sm:$0x3]
    %v735 = vlaneseq
    %v736 = vshrl.u32 %v735, 7
    %v737 = vsub.s32 0, %v736
    %v738 = vrot.slane %v733, %v737
    %v739 = vlaneseq
    %v740 = vshrl.u32 %v739, 7
    %v741 = vsub.s32 1, %v740
    %v742 = vrot.slane %v733, %v741
    %v745 = vmul.f32 %v484, %v738
    %v746 = vmul.f32 %v485, %v742
    %v747 = vadd.f32 %v745, %v746
    %748 = vadd.xlane.f32.xlu0 %v747
    %v749 = vpop.xlane.xlu0 %748
    %v750 = vld [vmem:[%s8] sm:$0x3]
    %v752 = vlaneseq
    %v753 = vshrl.u32 %v752, 7
    %v754 = vsub.s32 0, %v753
    %v755 = vrot.slane %v750, %v754
    %v756 = vlaneseq
    %v757 = vshrl.u32 %v756, 7
    %v758 = vsub.s32 1, %v757
    %v759 = vrot.slane %v750, %v758
    %v762 = vmul.f32 %v731, %v755
    %v763 = vmul.f32 %v732, %v759
    %v764 = vadd.f32 %v762, %v763
    %765 = vadd.xlane.f32.xlu0 %v764
    %v766 = vpop.xlane.xlu0 %765
    %vm767 = vcmask 7168
    %v768 = vsel %vm767, %v749, %v766
    %v769 = vld [vmem:[#allocation9] sm:$0x1]
    %v771 = vlaneseq
    %v772 = vshrl.u32 %v771, 7
    %v773 = vsub.s32 0, %v772
    %v774 = vrot.slane %v769, %v773
    %v776 = vadd.f32 %v768, %v774
    %vm777 = vcmask 15360
    %778 = vst.msk [vmem:[%s10] sm:$0xff] %vm777, %v776
    // Predicated region
    $region62: #{critic_forward.1} parent=1 // pred_check
      _
    $region63: #{critic_forward.1} parent=1 // pred_check_branch
      %780 = sbr.rel (0) target = $region65
    $region64: #{critic_forward.1} parent=1 // pred_region
      _
    $region65: #{critic_forward.1} parent=1 // pred_fallthru
      _
    // Predicated region
    $region66: #{critic_forward.1} parent=1 // pred_check
      _
    $region67: #{critic_forward.1} parent=1 // pred_check_branch
      %782 = sbr.rel (0) target = $region69
    $region68: #{critic_forward.1} parent=1 // pred_region
      _
    $region69: #{critic_forward.1} parent=1 // pred_fallthru
      _
    %783 = vsyncpa [#allocation3], 1
    %784 = vsyncpa [#allocation5], 1
    %785 = vsyncpa [#allocation8], 1

</llo_original>
